<compile_context>
chip_gen: v7x
topology: tpu7x:2x2x1
jax: 0.10.0
libtpu: 0.0.40
codegen_flags: <defaults>
</compile_context>

<pallas_src>
import math

import jax
import jax.numpy as jnp
from jax.experimental import pallas as pl
from jax.experimental.pallas import tpu as pltpu


def _prelu(h, a):
    # PyTorch nn.PReLU with a single shared parameter per layer.
    return jnp.where(h > 0, h, a * h)


def _round_up(n, m):
    return ((n + m - 1) // m) * m


# -----------------------------------------------------------------------------
# Pass 1: h = hidden_stack( dropout(x) @ W0x + (emb @ W0e + b0) )
#   grid axis = K-tiles of N_ITEMS (reduction, "arbitrary")
# -----------------------------------------------------------------------------
def hidden_kernel(alpha_ref,                    # SMEM (n_hidden+1,) PReLU params
                  x_ref, mask_ref, w0x_ref,     # streamed: (B,TK), (B,TK), (TK,L) bf16
                  e0_ref, wh_ref, bh_ref,       # resident: (B,L) f32, (nh,L,L) bf16, (nh,1,L) f32
                  h_ref,                        # out: (B,L) f32
                  acc_ref):                     # scratch: (B,L) f32 accumulator
    k = pl.program_id(0)
    n_hidden = wh_ref.shape[0]

    @pl.when(k == 0)
    def _():
        # emb @ W0e + b0 (hoisted to the wrapper) seeds the accumulator.
        acc_ref[...] = e0_ref[...]

    # dropout: mask already holds {0, 1/(1-p)}, so one fused multiply.
    x_drop = x_ref[...] * mask_ref[...]
    acc_ref[...] += jnp.dot(x_drop.astype(jnp.bfloat16), w0x_ref[...],
                            preferred_element_type=jnp.float32)

    @pl.when(k == pl.num_programs(0) - 1)
    def _():
        h = _prelu(acc_ref[...], alpha_ref[0])
        # Hidden stack is tiny and resident; static unroll is fine at n_hidden<=4.
        # TODO(synk): switch to lax.fori_loop(..., unroll=True) if n_hidden/L grow.
        for i in range(n_hidden):
            h = jnp.dot(h.astype(jnp.bfloat16), wh_ref[i],
                        preferred_element_type=jnp.float32) + bh_ref[i]
            h = _prelu(h, alpha_ref[i + 1])
        h_ref[...] = h                          # f32, elementwise tail kept in f32 (v5e)


# -----------------------------------------------------------------------------
# Pass 2: out = tanh(h @ Wout + bout), tiled over N_ITEMS output columns
#   grid axis = output tiles ("parallel" -> megacore shardable)
# -----------------------------------------------------------------------------
def output_kernel(h_ref, wout_ref, bout_ref, o_ref):
    y = jnp.dot(h_ref[...].astype(jnp.bfloat16), wout_ref[...],
                preferred_element_type=jnp.float32) + bout_ref[...]
    o_ref[...] = jnp.tanh(y).astype(o_ref.dtype)


# -----------------------------------------------------------------------------
# Params / wrapper
# -----------------------------------------------------------------------------
def init_params(key, n_items, emb_dim, latent_dim, n_hidden):
    ks = jax.random.split(key, 6)
    s = 0.05
    w0 = jax.random.normal(ks[1], (n_items + emb_dim, latent_dim), jnp.float32) * s
    return dict(
        embW=jax.random.normal(ks[0], (emb_dim, emb_dim), jnp.float32) * s,
        embb=jax.random.normal(ks[5], (1, emb_dim), jnp.float32) * s,
        # big, streamed weights stored in bf16 (halves HBM traffic, native MXU rate)
        w0x=w0[:n_items].astype(jnp.bfloat16),                   # (N_ITEMS, L)
        w0e=w0[n_items:],                                        # (EMB_DIM, L) f32 (wrapper-side)
        b0=jnp.zeros((1, latent_dim), jnp.float32),
        wh=(jax.random.normal(ks[2], (n_hidden, latent_dim, latent_dim), jnp.float32) * s
            ).astype(jnp.bfloat16),
        bh=jnp.zeros((n_hidden, 1, latent_dim), jnp.float32),
        wout=(jax.random.normal(ks[3], (latent_dim, n_items), jnp.float32) * s
              ).astype(jnp.bfloat16),
        bout=jnp.zeros((1, n_items), jnp.float32),
        alphas=jnp.full((n_hidden + 1,), 0.25, jnp.float32),     # PReLU default init
    )


def timestep_embedding(t, dim):
    half = dim // 2
    freqs = jnp.exp(-math.log(10000.0) * jnp.arange(half, dtype=jnp.float32) / half)
    args = t[:, None].astype(jnp.float32) * freqs[None, :]
    emb = jnp.concatenate([jnp.cos(args), jnp.sin(args)], axis=-1)
    if dim % 2:
        emb = jnp.concatenate([emb, jnp.zeros_like(emb[:, :1])], axis=-1)
    return emb


def sdrm_forward(params, x, t, dropout_key, *, tile_k=128, tile_n=128, training=True):
    B, n_items = x.shape
    L = params["wh"].shape[-1]
    emb_dim = params["embW"].shape[0]

    # --- tiny deterministic glue, hoisted out of the kernel (perf review) ---
    temb = timestep_embedding(t, emb_dim)
    emb = temb @ params["embW"] + params["embb"]                              # (B, EMB_DIM)
    e0 = emb @ params["w0e"].astype(jnp.float32) + params["b0"]               # (B, L)

    # --- dropout mask (p=0.5, training), scale 1/(1-p) folded into the mask ---
    if training:
        keep = jax.random.bernoulli(dropout_key, 0.5, x.shape)
        mask = keep.astype(jnp.float32) * 2.0
    else:
        mask = jnp.ones_like(x)

    # --- lane-dense zero-padding of the N_ITEMS axis to the tile sizes ---
    nk = _round_up(n_items, tile_k)
    nn = _round_up(n_items, tile_n)
    x_p = jnp.pad(x, ((0, 0), (0, nk - n_items)))
    mask_p = jnp.pad(mask, ((0, 0), (0, nk - n_items)))
    w0x_p = jnp.pad(params["w0x"], ((0, nk - n_items), (0, 0)))
    wout_p = jnp.pad(params["wout"], ((0, 0), (0, nn - n_items)))
    bout_p = jnp.pad(params["bout"], ((0, 0), (0, nn - n_items)))

    smem = pl.BlockSpec(memory_space=pltpu.MemorySpace.SMEM)
    vmem_limit = 48 * 1024 * 1024   # explicit cap with headroom; safe on v7x's 64 MiB VMEM

    # Pass 1: reduction over N_ITEMS K-tiles -> h (B, L)
    h = pl.pallas_call(
        hidden_kernel,
        out_shape=jax.ShapeDtypeStruct((B, L), jnp.float32),
        grid=(nk // tile_k,),
        in_specs=[
            smem,                                                      # alphas
            pl.BlockSpec((B, tile_k), lambda k: (0, k)),               # x tile
            pl.BlockSpec((B, tile_k), lambda k: (0, k)),               # dropout mask tile
            pl.BlockSpec((tile_k, L), lambda k: (k, 0)),               # W0x tile (bf16)
            pl.BlockSpec((B, L), lambda k: (0, 0)),                    # e0 (resident)
            pl.BlockSpec(params["wh"].shape, lambda k: (0, 0, 0)),     # wh (resident, bf16)
            pl.BlockSpec(params["bh"].shape, lambda k: (0, 0, 0)),     # bh (resident)
        ],
        out_specs=pl.BlockSpec((B, L), lambda k: (0, 0)),
        scratch_shapes=[pltpu.VMEM((B, L), jnp.float32)],
        compiler_params=pltpu.CompilerParams(
            dimension_semantics=("arbitrary",),
            vmem_limit_bytes=vmem_limit),
    )(params["alphas"], x_p, mask_p, w0x_p, e0, params["wh"], params["bh"])

    # Pass 2: tanh(h @ Wout + bout), lane-dense output tiles, parallel across TCs
    out_p = pl.pallas_call(
        output_kernel,
        out_shape=jax.ShapeDtypeStruct((B, nn), jnp.float32),
        grid=(nn // tile_n,),
        in_specs=[
            pl.BlockSpec((B, L), lambda j: (0, 0)),                    # h (resident)
            pl.BlockSpec((L, tile_n), lambda j: (0, j)),               # Wout tile (bf16)
            pl.BlockSpec((1, tile_n), lambda j: (0, j)),               # bout tile
        ],
        out_specs=pl.BlockSpec((B, tile_n), lambda j: (0, j)),
        compiler_params=pltpu.CompilerParams(
            dimension_semantics=("parallel",),
            vmem_limit_bytes=vmem_limit),
    )(h, wout_p, bout_p)

    return out_p[:, :n_items]


def sdrm_reference(params, x, t, dropout_key):
    """Pure-JAX (f32) reference mirroring the PyTorch forward, same dropout mask."""
    emb_dim = params["embW"].shape[0]
    temb = timestep_embedding(t, emb_dim)
    emb = temb @ params["embW"] + params["embb"]
    keep = jax.random.bernoulli(dropout_key, 0.5, x.shape)
    x_drop = x * keep.astype(jnp.float32) * 2.0
    h = (x_drop @ params["w0x"].astype(jnp.float32)
         + emb @ params["w0e"].astype(jnp.float32) + params["b0"])
    a = params["alphas"]
    h = jnp.where(h > 0, h, a[0] * h)
    for i in range(params["wh"].shape[0]):
        h = h @ params["wh"][i].astype(jnp.float32) + params["bh"][i]
        h = jnp.where(h > 0, h, a[i + 1] * h)
    return jnp.tanh(h @ params["wout"].astype(jnp.float32) + params["bout"])


if __name__ == "__main__":
    # Small but structurally faithful config (module defaults: LATENT_DIM=200, n_hidden=4).
    # LATENT_DIM is chosen lane-dense (256) per the perf review; N_ITEMS=200 exercises the
    # zero-padding path of the N_ITEMS tiling.
    N_ITEMS, EMB_DIM, LATENT_DIM, N_HIDDEN = 200, 32, 256, 2
    B = 8

    key = jax.random.PRNGKey(0)
    kp, kx, kt, kd = jax.random.split(key, 4)
    params = init_params(kp, N_ITEMS, EMB_DIM, LATENT_DIM, N_HIDDEN)

    x = jax.random.normal(kx, (B, N_ITEMS), jnp.float32)
    t = jax.random.randint(kt, (B,), 0, 1000)            # integer diffusion timesteps

    out = sdrm_forward(params, x, t, kd)
    jax.block_until_ready(out)

    ref = sdrm_reference(params, x, t, kd)
    assert out.shape == (B, N_ITEMS) and out.dtype == jnp.float32
    assert bool(jnp.all(jnp.isfinite(out)))
    assert bool(jnp.allclose(out, ref, rtol=5e-2, atol=5e-2))
    print("KERNEL_OK")
</pallas_src>

<mosaic_0001>
module attributes {stable_mosaic.version = 11 : i64} {
  func.func @hidden_kernel(%arg0: i32, %arg1: memref<3xf32, #tpu.memory_space<smem>>, %arg2: memref<8x128xf32, #tpu.memory_space<vmem>>, %arg3: memref<8x128xf32, #tpu.memory_space<vmem>>, %arg4: memref<128x256xbf16, #tpu.memory_space<vmem>>, %arg5: memref<8x256xf32, #tpu.memory_space<vmem>>, %arg6: memref<2x256x256xbf16, #tpu.memory_space<vmem>>, %arg7: memref<2x1x256xf32, #tpu.memory_space<vmem>>, %arg8: memref<8x256xf32, #tpu.memory_space<vmem>>, %arg9: memref<8x256xf32, #tpu.memory_space<vmem>>) attributes {dimension_semantics = [#tpu.dimension_semantics<arbitrary>], iteration_bounds = array<i64: 2>, scalar_prefetch = 0 : i64, scratch_operands = 1 : i64, tpu.core_type = #tpu.core_type<tc>, window_params = [{transform_indices = @transform_0, window_bounds = array<i64: 3>}, {transform_indices = @transform_1, window_bounds = array<i64: 8, 128>}, {transform_indices = @transform_2, window_bounds = array<i64: 8, 128>}, {transform_indices = @transform_3, window_bounds = array<i64: 128, 256>}, {pipeline_mode = #tpu.pipeline_mode<synchronous>, transform_indices = @transform_4, window_bounds = array<i64: 8, 256>}, {pipeline_mode = #tpu.pipeline_mode<synchronous>, transform_indices = @transform_5, window_bounds = array<i64: 2, 256, 256>}, {pipeline_mode = #tpu.pipeline_mode<synchronous>, transform_indices = @transform_6, window_bounds = array<i64: 2, 1, 256>}, {pipeline_mode = #tpu.pipeline_mode<synchronous>, transform_indices = @transform_7, window_bounds = array<i64: 8, 256>}]} {
    %c0_i32 = arith.constant 0 : i32
    %0 = arith.cmpi eq, %arg0, %c0_i32 : i32
    %1 = arith.extui %0 : i1 to i32
    %c0_i32_0 = arith.constant 0 : i32
    %2 = arith.cmpi ne, %1, %c0_i32_0 : i32
    scf.if %2 {
      %c0_11 = arith.constant 0 : index
      %c0_12 = arith.constant 0 : index
      %15 = vector.load %arg5[%c0_11, %c0_12] : memref<8x256xf32, #tpu.memory_space<vmem>>, vector<8x256xf32>
      %c0_13 = arith.constant 0 : index
      %c0_14 = arith.constant 0 : index
      %16 = vector.load %arg9[%c0_13, %c0_14] : memref<8x256xf32, #tpu.memory_space<vmem>>, vector<8x256xf32>
      tpu.vector_store %arg9[%c0_13, %c0_14], %15 {strides = array<i32>} : memref<8x256xf32, #tpu.memory_space<vmem>>, vector<8x256xf32>,
    } else {
    }
    %c0 = arith.constant 0 : index
    %c0_1 = arith.constant 0 : index
    %3 = vector.load %arg2[%c0, %c0_1] : memref<8x128xf32, #tpu.memory_space<vmem>>, vector<8x128xf32>
    %c0_2 = arith.constant 0 : index
    %c0_3 = arith.constant 0 : index
    %4 = vector.load %arg3[%c0_2, %c0_3] : memref<8x128xf32, #tpu.memory_space<vmem>>, vector<8x128xf32>
    %5 = arith.mulf %3, %4 : vector<8x128xf32>
    %c0_4 = arith.constant 0 : index
    %c0_5 = arith.constant 0 : index
    %6 = vector.load %arg9[%c0_4, %c0_5] : memref<8x256xf32, #tpu.memory_space<vmem>>, vector<8x256xf32>
    %7 = arith.truncf %5 : vector<8x128xf32> to vector<8x128xbf16>
    %c0_6 = arith.constant 0 : index
    %c0_7 = arith.constant 0 : index
    %8 = vector.load %arg4[%c0_6, %c0_7] : memref<128x256xbf16, #tpu.memory_space<vmem>>, vector<128x256xbf16>
    %cst = arith.constant dense<0.000000e+00> : vector<8x256xf32>
    %9 = tpu.matmul %7, %8, %cst {dimension_numbers = #tpu.dot_dimension_numbers<[1], [0], [0], [1], [0, 0, 1, 1], [], []>} : vector<8x128xbf16>, vector<128x256xbf16>, vector<8x256xf32> -> vector<8x256xf32>
    %10 = arith.addf %6, %9 : vector<8x256xf32>
    %c0_8 = arith.constant 0 : index
    %c0_9 = arith.constant 0 : index
    %11 = vector.load %arg9[%c0_8, %c0_9] : memref<8x256xf32, #tpu.memory_space<vmem>>, vector<8x256xf32>
    tpu.vector_store %arg9[%c0_8, %c0_9], %10 {strides = array<i32>} : memref<8x256xf32, #tpu.memory_space<vmem>>, vector<8x256xf32>,
    %c1_i32 = arith.constant 1 : i32
    %12 = arith.cmpi eq, %arg0, %c1_i32 : i32
    %13 = arith.extui %12 : i1 to i32
    %c0_i32_10 = arith.constant 0 : i32
    %14 = arith.cmpi ne, %13, %c0_i32_10 : i32
    scf.if %14 {
      %c0_11 = arith.constant 0 : index
      %c0_12 = arith.constant 0 : index
      %15 = vector.load %arg9[%c0_11, %c0_12] : memref<8x256xf32, #tpu.memory_space<vmem>>, vector<8x256xf32>
      %c0_13 = arith.constant 0 : index
      %16 = memref.load %arg1[%c0_13] : memref<3xf32, #tpu.memory_space<smem>>
      %cst_14 = arith.constant 0.000000e+00 : f32
      %17 = vector.broadcast %cst_14 : f32 to vector<8x256xf32>
      %18 = arith.cmpf ogt, %15, %17 : vector<8x256xf32>
      %19 = vector.broadcast %16 : f32 to vector<8x256xf32>
      %20 = arith.mulf %19, %15 : vector<8x256xf32>
      %21 = arith.select %18, %15, %20 : vector<8x256xi1>, vector<8x256xf32>
      %22 = arith.truncf %21 : vector<8x256xf32> to vector<8x256xbf16>
      %c0_15 = arith.constant 0 : index
      %c0_16 = arith.constant 0 : index
      %c0_17 = arith.constant 0 : index
      %23 = vector.load %arg6[%c0_15, %c0_16, %c0_17] : memref<2x256x256xbf16, #tpu.memory_space<vmem>>, vector<1x256x256xbf16>
      %24 = vector.shape_cast %23 : vector<1x256x256xbf16> to vector<256x256xbf16>
      %cst_18 = arith.constant dense<0.000000e+00> : vector<8x256xf32>
      %25 = tpu.matmul %22, %24, %cst_18 {dimension_numbers = #tpu.dot_dimension_numbers<[1], [0], [0], [1], [0, 0, 1, 1], [], []>} : vector<8x256xbf16>, vector<256x256xbf16>, vector<8x256xf32> -> vector<8x256xf32>
      %c0_19 = arith.constant 0 : index
      %c0_20 = arith.constant 0 : index
      %c0_21 = arith.constant 0 : index
      %26 = vector.load %arg7[%c0_19, %c0_20, %c0_21] : memref<2x1x256xf32, #tpu.memory_space<vmem>>, vector<1x1x256xf32>
      %27 = vector.shape_cast %26 : vector<1x1x256xf32> to vector<1x256xf32>
      %28 = vector.broadcast %27 : vector<1x256xf32> to vector<8x256xf32>
      %29 = arith.addf %25, %28 : vector<8x256xf32>
      %c1 = arith.constant 1 : index
      %30 = memref.load %arg1[%c1] : memref<3xf32, #tpu.memory_space<smem>>
      %cst_22 = arith.constant 0.000000e+00 : f32
      %31 = vector.broadcast %cst_22 : f32 to vector<8x256xf32>
      %32 = arith.cmpf ogt, %29, %31 : vector<8x256xf32>
      %33 = vector.broadcast %30 : f32 to vector<8x256xf32>
      %34 = arith.mulf %33, %29 : vector<8x256xf32>
      %35 = arith.select %32, %29, %34 : vector<8x256xi1>, vector<8x256xf32>
      %36 = arith.truncf %35 : vector<8x256xf32> to vector<8x256xbf16>
      %c1_23 = arith.constant 1 : index
      %c0_24 = arith.constant 0 : index
      %c0_25 = arith.constant 0 : index
      %37 = vector.load %arg6[%c1_23, %c0_24, %c0_25] : memref<2x256x256xbf16, #tpu.memory_space<vmem>>, vector<1x256x256xbf16>
      %38 = vector.shape_cast %37 : vector<1x256x256xbf16> to vector<256x256xbf16>
      %cst_26 = arith.constant dense<0.000000e+00> : vector<8x256xf32>
      %39 = tpu.matmul %36, %38, %cst_26 {dimension_numbers = #tpu.dot_dimension_numbers<[1], [0], [0], [1], [0, 0, 1, 1], [], []>} : vector<8x256xbf16>, vector<256x256xbf16>, vector<8x256xf32> -> vector<8x256xf32>
      %c1_27 = arith.constant 1 : index
      %c0_28 = arith.constant 0 : index
      %c0_29 = arith.constant 0 : index
      %40 = vector.load %arg7[%c1_27, %c0_28, %c0_29] : memref<2x1x256xf32, #tpu.memory_space<vmem>>, vector<1x1x256xf32>
      %41 = vector.shape_cast %40 : vector<1x1x256xf32> to vector<1x256xf32>
      %42 = vector.broadcast %41 : vector<1x256xf32> to vector<8x256xf32>
      %43 = arith.addf %39, %42 : vector<8x256xf32>
      %c2 = arith.constant 2 : index
      %44 = memref.load %arg1[%c2] : memref<3xf32, #tpu.memory_space<smem>>
      %cst_30 = arith.constant 0.000000e+00 : f32
      %45 = vector.broadcast %cst_30 : f32 to vector<8x256xf32>
      %46 = arith.cmpf ogt, %43, %45 : vector<8x256xf32>
      %47 = vector.broadcast %44 : f32 to vector<8x256xf32>
      %48 = arith.mulf %47, %43 : vector<8x256xf32>
      %49 = arith.select %46, %43, %48 : vector<8x256xi1>, vector<8x256xf32>
      %c0_31 = arith.constant 0 : index
      %c0_32 = arith.constant 0 : index
      %50 = vector.load %arg8[%c0_31, %c0_32] : memref<8x256xf32, #tpu.memory_space<vmem>>, vector<8x256xf32>
      tpu.vector_store %arg8[%c0_31, %c0_32], %49 {strides = array<i32>} : memref<8x256xf32, #tpu.memory_space<vmem>>, vector<8x256xf32>,
    } else {
    }
    return
  }
  func.func @transform_0(%arg0: i32) -> i32 {
    %c0_i32 = arith.constant 0 : i32
    %c0_i32_0 = arith.constant 0 : i32
    return %c0_i32 : i32
  }
  func.func @transform_1(%arg0: i32) -> (i32, i32) {
    %c0_i32 = arith.constant 0 : i32
    %c0_i32_0 = arith.constant 0 : i32
    return %c0_i32, %arg0 : i32, i32
  }
  func.func @transform_2(%arg0: i32) -> (i32, i32) {
    %c0_i32 = arith.constant 0 : i32
    %c0_i32_0 = arith.constant 0 : i32
    return %c0_i32, %arg0 : i32, i32
  }
  func.func @transform_3(%arg0: i32) -> (i32, i32) {
    %c0_i32 = arith.constant 0 : i32
    %c0_i32_0 = arith.constant 0 : i32
    return %arg0, %c0_i32 : i32, i32
  }
  func.func @transform_4(%arg0: i32) -> (i32, i32) {
    %c0_i32 = arith.constant 0 : i32
    %c0_i32_0 = arith.constant 0 : i32
    %c0_i32_1 = arith.constant 0 : i32
    return %c0_i32, %c0_i32_0 : i32, i32
  }
  func.func @transform_5(%arg0: i32) -> (i32, i32, i32) {
    %c0_i32 = arith.constant 0 : i32
    %c0_i32_0 = arith.constant 0 : i32
    %c0_i32_1 = arith.constant 0 : i32
    %c0_i32_2 = arith.constant 0 : i32
    return %c0_i32, %c0_i32_0, %c0_i32_1 : i32, i32, i32
  }
  func.func @transform_6(%arg0: i32) -> (i32, i32, i32) {
    %c0_i32 = arith.constant 0 : i32
    %c0_i32_0 = arith.constant 0 : i32
    %c0_i32_1 = arith.constant 0 : i32
    %c0_i32_2 = arith.constant 0 : i32
    return %c0_i32, %c0_i32_0, %c0_i32_1 : i32, i32, i32
  }
  func.func @transform_7(%arg0: i32) -> (i32, i32) {
    %c0_i32 = arith.constant 0 : i32
    %c0_i32_0 = arith.constant 0 : i32
    %c0_i32_1 = arith.constant 0 : i32
    return %c0_i32, %c0_i32_0 : i32, i32
  }
}

</mosaic_0001>

<llo_original>
// kernel: tpu_custom_call.1
$region0: #{tpu_custom_call.1}
  #allocation0 [shape = 'u32[]', space=smem, size = 0x4, offset = 0x4, fixed_abs, tag = 'smem constant byte address 0x4 - core index']
  #allocation1 [shape = 'u32[144,128]{1,0:T(1,128)}', space=vmem, size = 0x12000, scoped, tag = 'internal scratch']
  #allocation2 [shape = 'f32[8,256]{1,0:T(8,128)}', space=vmem, size = 0x2000, scoped, tag = 'scratch operand']
  %s0 = inlined_call_operand.hbm [shape: f32[3], index: 0, kind: input, shape index: {}]
  %s1 = inlined_call_operand.hbm [shape: f32[8,256], index: 1, kind: input, shape index: {}]
  %s2 = inlined_call_operand.hbm [shape: f32[8,256], index: 2, kind: input, shape index: {}]
  %s3 = inlined_call_operand.hbm [shape: bf16[256,256], index: 3, kind: input, shape index: {}]
  %s4 = inlined_call_operand.hbm [shape: f32[8,256], index: 4, kind: input, shape index: {}]
  %s5 = inlined_call_operand.hbm [shape: bf16[2,256,256], index: 5, kind: input, shape index: {}]
  %s6 = inlined_call_operand.vmem [shape: f32[2,1,256], index: 6, kind: input, shape index: {}]
  %s7 = inlined_call_operand.hbm [shape: f32[8,256], index: 7, kind: output, shape index: {}]
  %s8 = sld [smem:[#allocation0]]
  $region93: #{tpu_custom_call.1} parent=0
    _
  %s10 = ssub.s32 1, %s8
  %s11 = scalar_select 0, %s10, %s8
  $region1: #{tpu_custom_call.1} parent=0
    #allocation3 [shape = 'u8[512]{0}', space=smem, size = 0x200, scoped, tag = 'input window, operand 0, single buffered']
    #allocation4 [shape = 's32[2]{0}', space=sflag, size = 0x8, scoped, tag = 'scoped memory for tpu_custom_call.1']
    #allocation5 [shape = 's32[2]{0}', space=sflag, size = 0x8, scoped, tag = 'scoped memory for tpu_custom_call.1']
    #allocation6 [shape = 's32[2]{0}', space=sflag, size = 0x8, scoped, tag = 'scoped memory for tpu_custom_call.1']
    #allocation7 [shape = 'u8[8192]{0}', space=vmem, size = 0x2000, scoped, tag = 'input window, operand 1']
    #allocation8 [shape = 'u8[8192]{0}', space=vmem, size = 0x2000, scoped, tag = 'input window, operand 2']
    #allocation9 [shape = 's32[2]{0}', space=sflag, size = 0x8, scoped, tag = 'scoped memory for tpu_custom_call.1']
    #allocation10 [shape = 'u8[131072]{0}', space=vmem, size = 0x20000, scoped, tag = 'input window, operand 3']
    #allocation11 [shape = 'u8[8192]{0}', space=vmem, size = 0x2000, scoped, tag = 'input window, operand 4, single buffered']
    #allocation12 [shape = 's32[1]{0}', space=sflag, size = 0x4, scoped, tag = 'scoped memory for tpu_custom_call.1']
    #allocation13 [shape = 'u8[262144]{0}', space=vmem, size = 0x40000, scoped, tag = 'input window, operand 5, single buffered']
    #allocation14 [shape = 'u8[8192]{0}', space=vmem, size = 0x2000, scoped, tag = 'output window, operand 0, single buffered']
    %12 = vsyncpa [#allocation6], 0
    %13 = vsyncpa [#allocation4], 0
    %s14 = scalar_lea.sflag [#allocation4], 1
    %15 = vsyncpa %s14, 0
    %16 = vsyncpa [#allocation9], 0
    %s17 = scalar_lea.sflag [#allocation9], 1
    %18 = vsyncpa %s17, 0
    %19 = vsyncpa [#allocation12], 0
    %20 = vsyncpa [#allocation5], 0
    loop: start=0, step=1, limit=4
    $region2: #{tpu_custom_call.1} parent=1 // loop_pre_header
      _
    $region3: #{tpu_custom_call.1} parent=1 // loop_header
      %s22 = sphi 0, %s26
      %p23 = scmp.ge.s32.totalorder %s22, 4
      %s30 = sphi 0, %s30
      %s32 = sphi 0, %s30
      %s33 = sphi 0, %s32
      %s47 = sphi 0, %s33
      %s53 = sphi 0, %s55
      %s56 = sphi 0, %s53
      %s57 = sphi 0, %s56
      %s73 = sphi 0, %s57
      %s79 = sphi 0, %s81
      %s82 = sphi 0, %s79
      %s83 = sphi 0, %s82
      %s99 = sphi 0, %s83
      %s105 = sphi 0, %s107
      %s108 = sphi 0, %s105
      %s109 = sphi 0, %s108
      %s125 = sphi 0, %s109
      %s129 = sphi 0, %s129
      %s131 = sphi 0, %s129
      %s132 = sphi 0, %s131
      %s146 = sphi 0, %s132
      %s150 = sphi 0, %s150
      %s152 = sphi 0, %s150
      %s153 = sphi 0, %s152
      %s167 = sphi 0, %s153
      %s171 = sphi 0, %s171
      %s173 = sphi 0, %s171
      %s174 = sphi 0, %s173
      %s188 = sphi 0, %s174
      %s192 = sphi 0, %s192
      %s194 = sphi 0, %s192
      %s195 = sphi 0, %s194
      %s209 = sphi 0, %s195
    $region4: #{tpu_custom_call.1} parent=1 // loop_header_branch
      %25 = sbr.rel (%p23) target = $region8
    $region5: #{tpu_custom_call.1} parent=1 // loop_body
      %s27 = ssub.s32 %s22, 1
      %s28 = ssub.s32 %s22, 2
      %s29 = sadd.s32 %s22, 1
      %s31 = sadd.s32 %s30, 1
      %p34 = scmp.eq.s32.totalorder %s22, 1
      %p35 = scmp.ne.s32.totalorder %s30, %s32
      %p36 = scmp.eq.s32.totalorder %s22, 0
      %p37 = por %p35, %p36
      %p38 = scmp.ne.s32.totalorder %s30, %s32
      %p39 = scmp.eq.s32.totalorder %s27, 1
      %p40 = por %p38, %p39
      %p41 = scmp.ne.s32.totalorder %s32, %s33
      %p42 = scmp.eq.s32.totalorder %s27, 0
      %p43 = por %p41, %p42
      %p44 = scmp.ne.s32.totalorder %s32, %s33
      %p45 = scmp.eq.s32.totalorder %s28, 1
      %p46 = por %p44, %p45
      %p48 = scmp.ne.s32.totalorder %s33, %s47
      %p49 = scmp.eq.s32.totalorder %s28, 0
      %p50 = por %p48, %p49
      %s51 = ssub.s32 %s22, %s29
      %p52 = scmp.eq.s32.totalorder %s51, 0
      %s54 = sadd.s32 %s53, 1
      %s55 = scalar_select %p52, %s53, %s54
      %p58 = pneg %p52
      %p59 = scmp.eq.s32.totalorder %s22, 1
      %p60 = por %p58, %p59
      %p61 = scmp.ne.s32.totalorder %s53, %s56
      %p62 = scmp.eq.s32.totalorder %s22, 0
      %p63 = por %p61, %p62
      %p64 = scmp.ne.s32.totalorder %s53, %s56
      %p65 = scmp.eq.s32.totalorder %s27, 1
      %p66 = por %p64, %p65
      %p67 = scmp.ne.s32.totalorder %s56, %s57
      %p68 = scmp.eq.s32.totalorder %s27, 0
      %p69 = por %p67, %p68
      %p70 = scmp.ne.s32.totalorder %s56, %s57
      %p71 = scmp.eq.s32.totalorder %s28, 1
      %p72 = por %p70, %p71
      %p74 = scmp.ne.s32.totalorder %s57, %s73
      %p75 = scmp.eq.s32.totalorder %s28, 0
      %p76 = por %p74, %p75
      %s77 = ssub.s32 %s22, %s29
      %p78 = scmp.eq.s32.totalorder %s77, 0
      %s80 = sadd.s32 %s79, 1
      %s81 = scalar_select %p78, %s79, %s80
      %p84 = pneg %p78
      %p85 = scmp.eq.s32.totalorder %s22, 1
      %p86 = por %p84, %p85
      %p87 = scmp.ne.s32.totalorder %s79, %s82
      %p88 = scmp.eq.s32.totalorder %s22, 0
      %p89 = por %p87, %p88
      %p90 = scmp.ne.s32.totalorder %s79, %s82
      %p91 = scmp.eq.s32.totalorder %s27, 1
      %p92 = por %p90, %p91
      %p93 = scmp.ne.s32.totalorder %s82, %s83
      %p94 = scmp.eq.s32.totalorder %s27, 0
      %p95 = por %p93, %p94
      %p96 = scmp.ne.s32.totalorder %s82, %s83
      %p97 = scmp.eq.s32.totalorder %s28, 1
      %p98 = por %p96, %p97
      %p100 = scmp.ne.s32.totalorder %s83, %s99
      %p101 = scmp.eq.s32.totalorder %s28, 0
      %p102 = por %p100, %p101
      %s103 = ssub.s32 %s22, %s29
      %p104 = scmp.eq.s32.totalorder %s103, 0
      %s106 = sadd.s32 %s105, 1
      %s107 = scalar_select %p104, %s105, %s106
      %p110 = pneg %p104
      %p111 = scmp.eq.s32.totalorder %s22, 1
      %p112 = por %p110, %p111
      %p113 = scmp.ne.s32.totalorder %s105, %s108
      %p114 = scmp.eq.s32.totalorder %s22, 0
      %p115 = por %p113, %p114
      %p116 = scmp.ne.s32.totalorder %s105, %s108
      %p117 = scmp.eq.s32.totalorder %s27, 1
      %p118 = por %p116, %p117
      %p119 = scmp.ne.s32.totalorder %s108, %s109
      %p120 = scmp.eq.s32.totalorder %s27, 0
      %p121 = por %p119, %p120
      %p122 = scmp.ne.s32.totalorder %s108, %s109
      %p123 = scmp.eq.s32.totalorder %s28, 1
      %p124 = por %p122, %p123
      %p126 = scmp.ne.s32.totalorder %s109, %s125
      %p127 = scmp.eq.s32.totalorder %s28, 0
      %p128 = por %p126, %p127
      %s130 = sadd.s32 %s129, 1
      %p133 = scmp.eq.s32.totalorder %s22, 1
      %p134 = scmp.ne.s32.totalorder %s129, %s131
      %p135 = scmp.eq.s32.totalorder %s22, 0
      %p136 = por %p134, %p135
      %p137 = scmp.ne.s32.totalorder %s129, %s131
      %p138 = scmp.eq.s32.totalorder %s27, 1
      %p139 = por %p137, %p138
      %p140 = scmp.ne.s32.totalorder %s131, %s132
      %p141 = scmp.eq.s32.totalorder %s27, 0
      %p142 = por %p140, %p141
      %p143 = scmp.ne.s32.totalorder %s131, %s132
      %p144 = scmp.eq.s32.totalorder %s28, 1
      %p145 = por %p143, %p144
      %p147 = scmp.ne.s32.totalorder %s132, %s146
      %p148 = scmp.eq.s32.totalorder %s28, 0
      %p149 = por %p147, %p148
      %s151 = sadd.s32 %s150, 1
      %p154 = scmp.eq.s32.totalorder %s22, 1
      %p155 = scmp.ne.s32.totalorder %s150, %s152
      %p156 = scmp.eq.s32.totalorder %s22, 0
      %p157 = por %p155, %p156
      %p158 = scmp.ne.s32.totalorder %s150, %s152
      %p159 = scmp.eq.s32.totalorder %s27, 1
      %p160 = por %p158, %p159
      %p161 = scmp.ne.s32.totalorder %s152, %s153
      %p162 = scmp.eq.s32.totalorder %s27, 0
      %p163 = por %p161, %p162
      %p164 = scmp.ne.s32.totalorder %s152, %s153
      %p165 = scmp.eq.s32.totalorder %s28, 1
      %p166 = por %p164, %p165
      %p168 = scmp.ne.s32.totalorder %s153, %s167
      %p169 = scmp.eq.s32.totalorder %s28, 0
      %p170 = por %p168, %p169
      %s172 = sadd.s32 %s171, 1
      %p175 = scmp.eq.s32.totalorder %s22, 1
      %p176 = scmp.ne.s32.totalorder %s171, %s173
      %p177 = scmp.eq.s32.totalorder %s22, 0
      %p178 = por %p176, %p177
      %p179 = scmp.ne.s32.totalorder %s171, %s173
      %p180 = scmp.eq.s32.totalorder %s27, 1
      %p181 = por %p179, %p180
      %p182 = scmp.ne.s32.totalorder %s173, %s174
      %p183 = scmp.eq.s32.totalorder %s27, 0
      %p184 = por %p182, %p183
      %p185 = scmp.ne.s32.totalorder %s173, %s174
      %p186 = scmp.eq.s32.totalorder %s28, 1
      %p187 = por %p185, %p186
      %p189 = scmp.ne.s32.totalorder %s174, %s188
      %p190 = scmp.eq.s32.totalorder %s28, 0
      %p191 = por %p189, %p190
      %s193 = sadd.s32 %s192, 1
      %p196 = scmp.eq.s32.totalorder %s22, 1
      %p197 = scmp.ne.s32.totalorder %s192, %s194
      %p198 = scmp.eq.s32.totalorder %s22, 0
      %p199 = por %p197, %p198
      %p200 = scmp.ne.s32.totalorder %s192, %s194
      %p201 = scmp.eq.s32.totalorder %s27, 1
      %p202 = por %p200, %p201
      %p203 = scmp.ne.s32.totalorder %s194, %s195
      %p204 = scmp.eq.s32.totalorder %s27, 0
      %p205 = por %p203, %p204
      %p206 = scmp.ne.s32.totalorder %s194, %s195
      %p207 = scmp.eq.s32.totalorder %s28, 1
      %p208 = por %p206, %p207
      %p210 = scmp.ne.s32.totalorder %s195, %s209
      %p211 = scmp.eq.s32.totalorder %s28, 0
      %p212 = por %p210, %p211
      %p213 = scmp.le.s32.totalorder 1, %s22
      %p214 = scmp.lt.s32.totalorder %s22, 3
      %p215 = pnand %p213, %p214
      %p216 = pneg %p215
      // Predicated region
      $region9: #{tpu_custom_call.1} parent=5 // pred_check
        _
      $region10: #{tpu_custom_call.1} parent=5 // pred_check_branch
        %218 = sbr.rel (%p215) target = $region12
      $region11: #{tpu_custom_call.1} parent=5 // pred_region
        %s219 = ssub.s32 %s22, 1
        // Predicated region
        $region13: #{tpu_custom_call.1} parent=11 // pred_check
          %p220 = pneg %p43
        $region14: #{tpu_custom_call.1} parent=11 // pred_check_branch
          %222 = sbr.rel (%p220) target = $region16
        $region15: #{tpu_custom_call.1} parent=11 // pred_region
          %s224 = ssub.s32 16, 16
          %225 = vsyncadd [#allocation6], %s224
          %228 = dma.hbm_to_smem %s0, 16, [#allocation3], [#allocation6]
        $region16: #{tpu_custom_call.1} parent=11 // pred_fallthru
          _
        // Predicated region
        $region17: #{tpu_custom_call.1} parent=11 // pred_check
          %p229 = pneg %p142
        $region18: #{tpu_custom_call.1} parent=11 // pred_check_branch
          %231 = sbr.rel (%p229) target = $region20
        $region19: #{tpu_custom_call.1} parent=11 // pred_region
          %s233 = ssub.s32 256, 256
          %234 = vsyncadd [#allocation12], %s233
          %s236 = sshll.u32 [#allocation11], 4
          %s237 = int_to_ptr.vmem [resolvable:$true] %s236
          %239 = dma.hbm_to_vmem [thread:$0]  %s4, 256, %s237, [#allocation12]
        $region20: #{tpu_custom_call.1} parent=11 // pred_fallthru
          _
        // Predicated region
        $region21: #{tpu_custom_call.1} parent=11 // pred_check
          %p240 = pneg %p163
        $region22: #{tpu_custom_call.1} parent=11 // pred_check_branch
          %242 = sbr.rel (%p240) target = $region24
        $region23: #{tpu_custom_call.1} parent=11 // pred_region
          %s244 = ssub.s32 8192, 8192
          %245 = vsyncadd [#allocation12], %s244
          %s246 = sshll.u32 [#allocation13], 4
          %s247 = int_to_ptr.vmem [resolvable:$true] %s246
          %252 = dma.hbm_to_vmem [thread:$0]  %s5, 8192, %s247, [#allocation12], 128, 128, 8
        $region24: #{tpu_custom_call.1} parent=11 // pred_fallthru
          _
        // Predicated region
        $region25: #{tpu_custom_call.1} parent=11 // pred_check
          %p253 = pneg %p184
        $region26: #{tpu_custom_call.1} parent=11 // pred_check_branch
          %255 = sbr.rel (%p253) target = $region28
        $region27: #{tpu_custom_call.1} parent=11 // pred_region
          _
        $region28: #{tpu_custom_call.1} parent=11 // pred_fallthru
          _
      $region12: #{tpu_custom_call.1} parent=5 // pred_fallthru
        _
      %p256 = scmp.lt.s32.totalorder %s22, 2
      // Predicated region
      $region29: #{tpu_custom_call.1} parent=5 // pred_check
        %p257 = pneg %p256
      $region30: #{tpu_custom_call.1} parent=5 // pred_check_branch
        %259 = sbr.rel (%p257) target = $region32
      $region31: #{tpu_custom_call.1} parent=5 // pred_region
        // Predicated region
        $region33: #{tpu_custom_call.1} parent=31 // pred_check
          %p260 = pneg %p63
        $region34: #{tpu_custom_call.1} parent=31 // pred_check_branch
          %262 = sbr.rel (%p260) target = $region36
        $region35: #{tpu_custom_call.1} parent=31 // pred_region
          %s263 = sand.u32 %s53, 1
          %s264 = scalar_lea.sflag [#allocation4], %s263
          %s265 = sand.u32 %s53, 1
          %s266 = smul.addr %s265, 8
          %s267 = scalar_lea.vmem [#allocation7], %s266
          %s269 = ssub.s32 128, 128
          %270 = vsyncadd %s264, %s269
          %s271 = smul.addr %s22, 128
          %s272 = scalar_lea.hbm %s1, %s271
          %s274 = sshll.u32 %s267, 4
          %s275 = int_to_ptr.vmem [resolvable:$true] %s274
          %277 = dma.hbm_to_vmem [thread:$0]  %s272, 128, %s275, %s264
        $region36: #{tpu_custom_call.1} parent=31 // pred_fallthru
          _
        // Predicated region
        $region37: #{tpu_custom_call.1} parent=31 // pred_check
          %p278 = pneg %p89
        $region38: #{tpu_custom_call.1} parent=31 // pred_check_branch
          %280 = sbr.rel (%p278) target = $region40
        $region39: #{tpu_custom_call.1} parent=31 // pred_region
          %s281 = sand.u32 %s22, 1
          %s282 = scalar_lea.sflag [#allocation9], %s281
          %s283 = sand.u32 %s79, 1
          %s284 = smul.addr %s283, 8
          %s285 = scalar_lea.vmem [#allocation8], %s284
          %s287 = ssub.s32 128, 128
          %288 = vsyncadd %s282, %s287
          %s289 = smul.addr %s22, 128
          %s290 = scalar_lea.hbm %s2, %s289
          %s292 = sshll.u32 %s285, 4
          %s293 = int_to_ptr.vmem [resolvable:$true] %s292
          %295 = dma.hbm_to_vmem [thread:$0]  %s290, 128, %s293, %s282
        $region40: #{tpu_custom_call.1} parent=31 // pred_fallthru
          _
        // Predicated region
        $region41: #{tpu_custom_call.1} parent=31 // pred_check
          %p296 = pneg %p115
        $region42: #{tpu_custom_call.1} parent=31 // pred_check_branch
          %298 = sbr.rel (%p296) target = $region44
        $region43: #{tpu_custom_call.1} parent=31 // pred_region
          %s299 = sand.u32 %s22, 1
          %s300 = scalar_lea.sflag [#allocation9], %s299
          %s301 = sand.u32 %s105, 1
          %s302 = smul.addr %s301, 128
          %s303 = scalar_lea.vmem [#allocation10], %s302
          %s304 = smul.u32 16, %s22
          %s306 = ssub.s32 2048, 2048
          %307 = vsyncadd %s300, %s306
          %s308 = smul.addr %s304, 2
          %s309 = smul.addr %s308, 64
          %s310 = scalar_lea.hbm %s3, %s309
          %s311 = sshll.u32 %s303, 4
          %s312 = int_to_ptr.vmem [resolvable:$true] %s311
          %317 = dma.hbm_to_vmem [thread:$0]  %s310, 2048, %s312, %s300, 128, 128, 8
        $region44: #{tpu_custom_call.1} parent=31 // pred_fallthru
          _
      $region32: #{tpu_custom_call.1} parent=5 // pred_fallthru
        _
      %p318 = scmp.le.s32.totalorder 1, %s22
      %p319 = scmp.lt.s32.totalorder %s22, 3
      %p320 = pnand %p318, %p319
      %p321 = pneg %p320
      // Predicated region
      $region45: #{tpu_custom_call.1} parent=5 // pred_check
        _
      $region46: #{tpu_custom_call.1} parent=5 // pred_check_branch
        %323 = sbr.rel (%p320) target = $region48
      $region47: #{tpu_custom_call.1} parent=5 // pred_region
        %s324 = ssub.s32 %s22, 1
        // Predicated region
        $region49: #{tpu_custom_call.1} parent=47 // pred_check
          %p325 = pneg %p43
        $region50: #{tpu_custom_call.1} parent=47 // pred_check_branch
          %327 = sbr.rel (%p325) target = $region52
        $region51: #{tpu_custom_call.1} parent=47 // pred_region
          %328 = dma.done [#allocation6], 16
        $region52: #{tpu_custom_call.1} parent=47 // pred_fallthru
          _
        %s329 = sand.u32 %s56, 1
        %s330 = scalar_lea.sflag [#allocation4], %s329
        %s331 = sand.u32 %s56, 1
        %s332 = smul.addr %s331, 8
        %s333 = scalar_lea.vmem [#allocation7], %s332
        // Predicated region
        $region53: #{tpu_custom_call.1} parent=47 // pred_check
          %p334 = pneg %p69
        $region54: #{tpu_custom_call.1} parent=47 // pred_check_branch
          %336 = sbr.rel (%p334) target = $region56
        $region55: #{tpu_custom_call.1} parent=47 // pred_region
          %337 = dma.done %s330, 128
        $region56: #{tpu_custom_call.1} parent=47 // pred_fallthru
          _
        %s338 = sand.u32 %s27, 1
        %s339 = scalar_lea.sflag [#allocation9], %s338
        %s340 = sand.u32 %s82, 1
        %s341 = smul.addr %s340, 8
        %s342 = scalar_lea.vmem [#allocation8], %s341
        // Predicated region
        $region57: #{tpu_custom_call.1} parent=47 // pred_check
          %p343 = pneg %p95
        $region58: #{tpu_custom_call.1} parent=47 // pred_check_branch
          %345 = sbr.rel (%p343) target = $region60
        $region59: #{tpu_custom_call.1} parent=47 // pred_region
          %346 = dma.done %s339, 128
        $region60: #{tpu_custom_call.1} parent=47 // pred_fallthru
          _
        %s347 = sand.u32 %s27, 1
        %s348 = scalar_lea.sflag [#allocation9], %s347
        %s349 = sand.u32 %s108, 1
        %s350 = smul.addr %s349, 128
        %s351 = scalar_lea.vmem [#allocation10], %s350
        // Predicated region
        $region61: #{tpu_custom_call.1} parent=47 // pred_check
          %p352 = pneg %p121
        $region62: #{tpu_custom_call.1} parent=47 // pred_check_branch
          %354 = sbr.rel (%p352) target = $region64
        $region63: #{tpu_custom_call.1} parent=47 // pred_region
          %355 = dma.done %s348, 2048
        $region64: #{tpu_custom_call.1} parent=47 // pred_fallthru
          _
        // Predicated region
        $region65: #{tpu_custom_call.1} parent=47 // pred_check
          %p356 = pneg %p142
        $region66: #{tpu_custom_call.1} parent=47 // pred_check_branch
          %358 = sbr.rel (%p356) target = $region68
        $region67: #{tpu_custom_call.1} parent=47 // pred_region
          %359 = dma.done [#allocation12], 256
        $region68: #{tpu_custom_call.1} parent=47 // pred_fallthru
          _
        // Predicated region
        $region69: #{tpu_custom_call.1} parent=47 // pred_check
          %p360 = pneg %p163
        $region70: #{tpu_custom_call.1} parent=47 // pred_check_branch
          %362 = sbr.rel (%p360) target = $region72
        $region71: #{tpu_custom_call.1} parent=47 // pred_region
          %363 = dma.done [#allocation12], 8192
        $region72: #{tpu_custom_call.1} parent=47 // pred_fallthru
          _
        %364 = sfence
        %p365 = pneg %p43
        %p366 = pneg %p40
        %s367 = sand.u32 %s56, 1
        %s368 = scalar_lea.sflag [#allocation4], %s367
        %s369 = sand.u32 %s56, 1
        %s370 = smul.addr %s369, 8
        %s371 = scalar_lea.vmem [#allocation7], %s370
        %p372 = pneg %p69
        %p373 = pneg %p66
        %s374 = sand.u32 %s27, 1
        %s375 = scalar_lea.sflag [#allocation9], %s374
        %s376 = sand.u32 %s82, 1
        %s377 = smul.addr %s376, 8
        %s378 = scalar_lea.vmem [#allocation8], %s377
        %p379 = pneg %p95
        %p380 = pneg %p92
        %s381 = sand.u32 %s27, 1
        %s382 = scalar_lea.sflag [#allocation9], %s381
        %s383 = sand.u32 %s108, 1
        %s384 = smul.addr %s383, 128
        %s385 = scalar_lea.vmem [#allocation10], %s384
        %p386 = pneg %p121
        %p387 = pneg %p118
        %p388 = pneg %p142
        %p389 = pneg %p139
        %p390 = pneg %p163
        %p391 = pneg %p160
        %p392 = pneg %p184
        %p393 = pneg %p181
        %p394 = pneg %p205
        %p395 = pneg %p202
        %s396 = smul.u32 16, %s27
        %p398 = scmp.eq.s32.totalorder %s27, 0
        // Predicated region
        $region73: #{tpu_custom_call.1} parent=47 // pred_check
          %p399 = pneg %p398
        $region74: #{tpu_custom_call.1} parent=47 // pred_check_branch
          %401 = sbr.rel (%p399) target = $region76
        $region75: #{tpu_custom_call.1} parent=47 // pred_region
          %v402 = vld [vmem:[#allocation11] sm:$0xff]
          %v403 = vld [vmem:[#allocation11 + $0x8] sm:$0xff]
          %404 = vst [vmem:[#allocation2] sm:$0xff] %v402
          %405 = vst [vmem:[#allocation2 + $0x8] sm:$0xff] %v403
        $region76: #{tpu_custom_call.1} parent=47 // pred_fallthru
          _
        %v406 = vld [vmem:[%s333] sm:$0xff]
        %v407 = vld [vmem:[%s342] sm:$0xff]
        %v408 = vmul.f32 %v406, %v407
        %v409 = vld [vmem:[#allocation2] sm:$0xff]
        %v410 = vld [vmem:[#allocation2 + $0x8] sm:$0xff]
        %v411 = vpack.c.bf16 %v408, %v408
        %v412 = vld [vmem:[%s351] sm:$0xff]
        %v413 = vld [vmem:[%s351 + $0x8] sm:$0xff]
        %v414 = vld [vmem:[%s351 + $0x10] sm:$0xff]
        %v415 = vld [vmem:[%s351 + $0x18] sm:$0xff]
        %v416 = vld [vmem:[%s351 + $0x20] sm:$0xff]
        %v417 = vld [vmem:[%s351 + $0x28] sm:$0xff]
        %v418 = vld [vmem:[%s351 + $0x30] sm:$0xff]
        %v419 = vld [vmem:[%s351 + $0x38] sm:$0xff]
        %v420 = vld [vmem:[%s351 + $0x40] sm:$0xff]
        %v421 = vld [vmem:[%s351 + $0x48] sm:$0xff]
        %v422 = vld [vmem:[%s351 + $0x50] sm:$0xff]
        %v423 = vld [vmem:[%s351 + $0x58] sm:$0xff]
        %v424 = vld [vmem:[%s351 + $0x60] sm:$0xff]
        %v425 = vld [vmem:[%s351 + $0x68] sm:$0xff]
        %v426 = vld [vmem:[%s351 + $0x70] sm:$0xff]
        %v427 = vld [vmem:[%s351 + $0x78] sm:$0xff]
        %v444 = vunpack.c.l.b16 %v412
        %v445 = vunpack.c.h.b16 %v412
        %v446 = vunpack.c.l.b16 %v413
        %v447 = vunpack.c.h.b16 %v413
        %v448 = vunpack.c.l.b16 %v414
        %v449 = vunpack.c.h.b16 %v414
        %v450 = vunpack.c.l.b16 %v415
        %v451 = vunpack.c.h.b16 %v415
        %v452 = vunpack.c.l.b16 %v416
        %v453 = vunpack.c.h.b16 %v416
        %v454 = vunpack.c.l.b16 %v417
        %v455 = vunpack.c.h.b16 %v417
        %v456 = vunpack.c.l.b16 %v418
        %v457 = vunpack.c.h.b16 %v418
        %v458 = vunpack.c.l.b16 %v419
        %v459 = vunpack.c.h.b16 %v419
        %v460 = vunpack.c.l.b16 %v420
        %v461 = vunpack.c.h.b16 %v420
        %v462 = vunpack.c.l.b16 %v421
        %v463 = vunpack.c.h.b16 %v421
        %v464 = vunpack.c.l.b16 %v422
        %v465 = vunpack.c.h.b16 %v422
        %v466 = vunpack.c.l.b16 %v423
        %v467 = vunpack.c.h.b16 %v423
        %v468 = vunpack.c.l.b16 %v424
        %v469 = vunpack.c.h.b16 %v424
        %v470 = vunpack.c.l.b16 %v425
        %v471 = vunpack.c.h.b16 %v425
        %v472 = vunpack.c.l.b16 %v426
        %v473 = vunpack.c.h.b16 %v426
        %v474 = vunpack.c.l.b16 %v427
        %v475 = vunpack.c.h.b16 %v427
        %v476 = vpack.c.b16 %v446, %v444
        %v477 = vpack.c.b16 %v447, %v445
        %v478 = vpack.c.b16 %v450, %v448
        %v479 = vpack.c.b16 %v451, %v449
        %v480 = vpack.c.b16 %v454, %v452
        %v481 = vpack.c.b16 %v455, %v453
        %v482 = vpack.c.b16 %v458, %v456
        %v483 = vpack.c.b16 %v459, %v457
        %v484 = vpack.c.b16 %v462, %v460
        %v485 = vpack.c.b16 %v463, %v461
        %v486 = vpack.c.b16 %v466, %v464
        %v487 = vpack.c.b16 %v467, %v465
        %v488 = vpack.c.b16 %v470, %v468
        %v489 = vpack.c.b16 %v471, %v469
        %v490 = vpack.c.b16 %v474, %v472
        %v491 = vpack.c.b16 %v475, %v473
        %508 = vmatprep.subr.bf16.mxu0 %v477
        %509 = vmatpush1.bf16.msra.mxu0 %v476
        %510 = vmatprep.subr.bf16.mxu0 %v479
        %511 = vmatpush1.bf16.msra.mxu0 %v478
        %512 = vmatprep.subr.bf16.mxu0 %v481
        %513 = vmatpush1.bf16.msra.mxu0 %v480
        %514 = vmatprep.subr.bf16.mxu0 %v483
        %515 = vmatpush1.bf16.msra.mxu0 %v482
        %516 = vmatprep.subr.bf16.mxu0 %v485
        %517 = vmatpush1.bf16.msra.mxu0 %v484
        %518 = vmatprep.subr.bf16.mxu0 %v487
        %519 = vmatpush1.bf16.msra.mxu0 %v486
        %520 = vmatprep.subr.bf16.mxu0 %v489
        %521 = vmatpush1.bf16.msra.mxu0 %v488
        %522 = vmatprep.subr.bf16.mxu0 %v491
        %523 = vmatpush1.bf16.msra.mxu0 %v490
        %524 = vmatprep.subr.bf16.mxu0 0
        %525 = vmatpush1.bf16.msra.mxu0 0
        %526 = vmatprep.subr.bf16.mxu0 0
        %527 = vmatpush1.bf16.msra.mxu0 0
        %528 = vmatprep.subr.bf16.mxu0 0
        %529 = vmatpush1.bf16.msra.mxu0 0
        %530 = vmatprep.subr.bf16.mxu0 0
        %531 = vmatpush1.bf16.msra.mxu0 0
        %532 = vmatprep.subr.bf16.mxu0 0
        %533 = vmatpush1.bf16.msra.mxu0 0
        %534 = vmatprep.subr.bf16.mxu0 0
        %535 = vmatpush1.bf16.msra.mxu0 0
        %536 = vmatprep.subr.bf16.mxu0 0
        %537 = vmatpush1.bf16.msra.mxu0 0
        %538 = vmatprep.subr.bf16.mxu0 0
        %539 = vmatpush1.bf16.msra.mxu0 0
        %540 = vmatprep.mubr.bf16.mxu0 0
        %541 = vmatmul.mubr.bf16.gmra.mrb[0].mxu0 %v411
        %v542 = vpop.f32.mrb[0].mxu0
        %v543 = vadd.f32 0.0, %v542
        %v544 = vpop.f32.mrb[0].mxu0
        %v545 = vadd.f32 0.0, %v544
        %v546 = vpop.f32.mrb[0].mxu0
        %v547 = vpop.f32.mrb[0].mxu0
        %548 = vdwg.mxu0
        %v549 = vadd.f32 %v409, %v543
        %v550 = vadd.f32 %v410, %v545
        %551 = vst [vmem:[#allocation2] sm:$0xff] %v549
        %552 = vst [vmem:[#allocation2 + $0x8] sm:$0xff] %v550
        %p553 = scmp.eq.s32.totalorder %s27, 1
        // Predicated region
        $region77: #{tpu_custom_call.1} parent=47 // pred_check
          %p554 = pneg %p553
        $region78: #{tpu_custom_call.1} parent=47 // pred_check_branch
          %556 = sbr.rel (%p554) target = $region80
        $region79: #{tpu_custom_call.1} parent=47 // pred_region
          %v557 = vld [vmem:[#allocation2] sm:$0xff]
          %v558 = vld [vmem:[#allocation2 + $0x8] sm:$0xff]
          %s559 = sld [smem:[#allocation3]]
          %vm560 = vcmp.gt.f32.partialorder %v557, 0.0
          %vm561 = vcmp.gt.f32.partialorder %v558, 0.0
          %v562 = vstv %s559
          %v563 = vmul.f32 %v562, %v557
          %v564 = vmul.f32 %v562, %v558
          %v565 = vsel %vm560, %v557, %v563
          %v566 = vsel %vm561, %v558, %v564
          %v567 = vpack.c.bf16 %v565, %v565
          %v568 = vpack.c.bf16 %v566, %v566
          %v569 = vld [vmem:[#allocation13] sm:$0xff]
          %v570 = vld [vmem:[#allocation13 + $0x8] sm:$0xff]
          %v571 = vld [vmem:[#allocation13 + $0x10] sm:$0xff]
          %v572 = vld [vmem:[#allocation13 + $0x18] sm:$0xff]
          %v573 = vld [vmem:[#allocation13 + $0x20] sm:$0xff]
          %v574 = vld [vmem:[#allocation13 + $0x28] sm:$0xff]
          %v575 = vld [vmem:[#allocation13 + $0x30] sm:$0xff]
          %v576 = vld [vmem:[#allocation13 + $0x38] sm:$0xff]
          %v577 = vld [vmem:[#allocation13 + $0x40] sm:$0xff]
          %v578 = vld [vmem:[#allocation13 + $0x48] sm:$0xff]
          %v579 = vld [vmem:[#allocation13 + $0x50] sm:$0xff]
          %v580 = vld [vmem:[#allocation13 + $0x58] sm:$0xff]
          %v581 = vld [vmem:[#allocation13 + $0x60] sm:$0xff]
          %v582 = vld [vmem:[#allocation13 + $0x68] sm:$0xff]
          %v583 = vld [vmem:[#allocation13 + $0x70] sm:$0xff]
          %v584 = vld [vmem:[#allocation13 + $0x78] sm:$0xff]
          %v585 = vld [vmem:[#allocation13 + $0x80] sm:$0xff]
          %v586 = vld [vmem:[#allocation13 + $0x88] sm:$0xff]
          %v587 = vld [vmem:[#allocation13 + $0x90] sm:$0xff]
          %v588 = vld [vmem:[#allocation13 + $0x98] sm:$0xff]
          %v589 = vld [vmem:[#allocation13 + $0xa0] sm:$0xff]
          %v590 = vld [vmem:[#allocation13 + $0xa8] sm:$0xff]
          %v591 = vld [vmem:[#allocation13 + $0xb0] sm:$0xff]
          %v592 = vld [vmem:[#allocation13 + $0xb8] sm:$0xff]
          %v593 = vld [vmem:[#allocation13 + $0xc0] sm:$0xff]
          %v594 = vld [vmem:[#allocation13 + $0xc8] sm:$0xff]
          %v595 = vld [vmem:[#allocation13 + $0xd0] sm:$0xff]
          %v596 = vld [vmem:[#allocation13 + $0xd8] sm:$0xff]
          %v597 = vld [vmem:[#allocation13 + $0xe0] sm:$0xff]
          %v598 = vld [vmem:[#allocation13 + $0xe8] sm:$0xff]
          %v599 = vld [vmem:[#allocation13 + $0xf0] sm:$0xff]
          %v600 = vld [vmem:[#allocation13 + $0xf8] sm:$0xff]
          %v601 = vld [vmem:[%s6] sm:$0x3]
          %v603 = vlaneseq
          %v604 = vshrl.u32 %v603, 7
          %v605 = vsub.s32 0, %v604
          %v606 = vrot.slane %v601, %v605
          %v607 = vlaneseq
          %v608 = vshrl.u32 %v607, 7
          %v609 = vsub.s32 1, %v608
          %v610 = vrot.slane %v601, %v609
          %v645 = vunpack.c.l.b16 %v569
          %v646 = vunpack.c.h.b16 %v569
          %v647 = vunpack.c.l.b16 %v570
          %v648 = vunpack.c.h.b16 %v570
          %v649 = vunpack.c.l.b16 %v571
          %v650 = vunpack.c.h.b16 %v571
          %v651 = vunpack.c.l.b16 %v572
          %v652 = vunpack.c.h.b16 %v572
          %v653 = vunpack.c.l.b16 %v573
          %v654 = vunpack.c.h.b16 %v573
          %v655 = vunpack.c.l.b16 %v574
          %v656 = vunpack.c.h.b16 %v574
          %v657 = vunpack.c.l.b16 %v575
          %v658 = vunpack.c.h.b16 %v575
          %v659 = vunpack.c.l.b16 %v576
          %v660 = vunpack.c.h.b16 %v576
          %v661 = vunpack.c.l.b16 %v577
          %v662 = vunpack.c.h.b16 %v577
          %v663 = vunpack.c.l.b16 %v578
          %v664 = vunpack.c.h.b16 %v578
          %v665 = vunpack.c.l.b16 %v579
          %v666 = vunpack.c.h.b16 %v579
          %v667 = vunpack.c.l.b16 %v580
          %v668 = vunpack.c.h.b16 %v580
          %v669 = vunpack.c.l.b16 %v581
          %v670 = vunpack.c.h.b16 %v581
          %v671 = vunpack.c.l.b16 %v582
          %v672 = vunpack.c.h.b16 %v582
          %v673 = vunpack.c.l.b16 %v583
          %v674 = vunpack.c.h.b16 %v583
          %v675 = vunpack.c.l.b16 %v584
          %v676 = vunpack.c.h.b16 %v584
          %v677 = vunpack.c.l.b16 %v585
          %v678 = vunpack.c.h.b16 %v585
          %v679 = vunpack.c.l.b16 %v586
          %v680 = vunpack.c.h.b16 %v586
          %v681 = vunpack.c.l.b16 %v587
          %v682 = vunpack.c.h.b16 %v587
          %v683 = vunpack.c.l.b16 %v588
          %v684 = vunpack.c.h.b16 %v588
          %v685 = vunpack.c.l.b16 %v589
          %v686 = vunpack.c.h.b16 %v589
          %v687 = vunpack.c.l.b16 %v590
          %v688 = vunpack.c.h.b16 %v590
          %v689 = vunpack.c.l.b16 %v591
          %v690 = vunpack.c.h.b16 %v591
          %v691 = vunpack.c.l.b16 %v592
          %v692 = vunpack.c.h.b16 %v592
          %v693 = vunpack.c.l.b16 %v593
          %v694 = vunpack.c.h.b16 %v593
          %v695 = vunpack.c.l.b16 %v594
          %v696 = vunpack.c.h.b16 %v594
          %v697 = vunpack.c.l.b16 %v595
          %v698 = vunpack.c.h.b16 %v595
          %v699 = vunpack.c.l.b16 %v596
          %v700 = vunpack.c.h.b16 %v596
          %v701 = vunpack.c.l.b16 %v597
          %v702 = vunpack.c.h.b16 %v597
          %v703 = vunpack.c.l.b16 %v598
          %v704 = vunpack.c.h.b16 %v598
          %v705 = vunpack.c.l.b16 %v599
          %v706 = vunpack.c.h.b16 %v599
          %v707 = vunpack.c.l.b16 %v600
          %v708 = vunpack.c.h.b16 %v600
          %v709 = vpack.c.b16 %v647, %v645
          %v710 = vpack.c.b16 %v648, %v646
          %v711 = vpack.c.b16 %v651, %v649
          %v712 = vpack.c.b16 %v652, %v650
          %v713 = vpack.c.b16 %v655, %v653
          %v714 = vpack.c.b16 %v656, %v654
          %v715 = vpack.c.b16 %v659, %v657
          %v716 = vpack.c.b16 %v660, %v658
          %v717 = vpack.c.b16 %v663, %v661
          %v718 = vpack.c.b16 %v664, %v662
          %v719 = vpack.c.b16 %v667, %v665
          %v720 = vpack.c.b16 %v668, %v666
          %v721 = vpack.c.b16 %v671, %v669
          %v722 = vpack.c.b16 %v672, %v670
          %v723 = vpack.c.b16 %v675, %v673
          %v724 = vpack.c.b16 %v676, %v674
          %v725 = vpack.c.b16 %v679, %v677
          %v726 = vpack.c.b16 %v680, %v678
          %v727 = vpack.c.b16 %v683, %v681
          %v728 = vpack.c.b16 %v684, %v682
          %v729 = vpack.c.b16 %v687, %v685
          %v730 = vpack.c.b16 %v688, %v686
          %v731 = vpack.c.b16 %v691, %v689
          %v732 = vpack.c.b16 %v692, %v690
          %v733 = vpack.c.b16 %v695, %v693
          %v734 = vpack.c.b16 %v696, %v694
          %v735 = vpack.c.b16 %v699, %v697
          %v736 = vpack.c.b16 %v700, %v698
          %v737 = vpack.c.b16 %v703, %v701
          %v738 = vpack.c.b16 %v704, %v702
          %v739 = vpack.c.b16 %v707, %v705
          %v740 = vpack.c.b16 %v708, %v706
          %773 = vmatprep.subr.bf16.mxu0 %v710
          %774 = vmatpush1.bf16.msra.mxu0 %v709
          %775 = vmatprep.subr.bf16.mxu0 %v712
          %776 = vmatpush1.bf16.msra.mxu0 %v711
          %777 = vmatprep.subr.bf16.mxu0 %v714
          %778 = vmatpush1.bf16.msra.mxu0 %v713
          %779 = vmatprep.subr.bf16.mxu0 %v716
          %780 = vmatpush1.bf16.msra.mxu0 %v715
          %781 = vmatprep.subr.bf16.mxu0 %v718
          %782 = vmatpush1.bf16.msra.mxu0 %v717
          %783 = vmatprep.subr.bf16.mxu0 %v720
          %784 = vmatpush1.bf16.msra.mxu0 %v719
          %785 = vmatprep.subr.bf16.mxu0 %v722
          %786 = vmatpush1.bf16.msra.mxu0 %v721
          %787 = vmatprep.subr.bf16.mxu0 %v724
          %788 = vmatpush1.bf16.msra.mxu0 %v723
          %789 = vmatprep.subr.bf16.mxu0 %v726
          %790 = vmatpush1.bf16.msra.mxu0 %v725
          %791 = vmatprep.subr.bf16.mxu0 %v728
          %792 = vmatpush1.bf16.msra.mxu0 %v727
          %793 = vmatprep.subr.bf16.mxu0 %v730
          %794 = vmatpush1.bf16.msra.mxu0 %v729
          %795 = vmatprep.subr.bf16.mxu0 %v732
          %796 = vmatpush1.bf16.msra.mxu0 %v731
          %797 = vmatprep.subr.bf16.mxu0 %v734
          %798 = vmatpush1.bf16.msra.mxu0 %v733
          %799 = vmatprep.subr.bf16.mxu0 %v736
          %800 = vmatpush1.bf16.msra.mxu0 %v735
          %801 = vmatprep.subr.bf16.mxu0 %v738
          %802 = vmatpush1.bf16.msra.mxu0 %v737
          %803 = vmatprep.subr.bf16.mxu0 %v740
          %804 = vmatpush1.bf16.msra.mxu0 %v739
          %805 = vmatprep.mubr.bf16.mxu0 %v568
          %806 = vmatmul.mubr.bf16.gmra.mrb[0].mxu0 %v567
          %v807 = vpop.f32.mrb[0].mxu0
          %v808 = vadd.f32 %v606, %v807
          %v809 = vpop.f32.mrb[0].mxu0
          %v810 = vadd.f32 %v610, %v809
          %v811 = vpop.f32.mrb[0].mxu0
          %v812 = vpop.f32.mrb[0].mxu0
          %813 = vdwg.mxu0
          %s814 = sld [smem:[#allocation3 + $0x1]]
          %vm815 = vcmp.gt.f32.partialorder %v808, 0.0
          %vm816 = vcmp.gt.f32.partialorder %v810, 0.0
          %v817 = vstv %s814
          %v818 = vmul.f32 %v817, %v808
          %v819 = vmul.f32 %v817, %v810
          %v820 = vsel %vm815, %v808, %v818
          %v821 = vsel %vm816, %v810, %v819
          %v822 = vpack.c.bf16 %v820, %v820
          %v823 = vpack.c.bf16 %v821, %v821
          %s824 = scalar_lea.vmem [#allocation13], 256
          %v825 = vld [vmem:[%s824] sm:$0xff]
          %v826 = vld [vmem:[%s824 + $0x8] sm:$0xff]
          %v827 = vld [vmem:[%s824 + $0x10] sm:$0xff]
          %v828 = vld [vmem:[%s824 + $0x18] sm:$0xff]
          %v829 = vld [vmem:[%s824 + $0x20] sm:$0xff]
          %v830 = vld [vmem:[%s824 + $0x28] sm:$0xff]
          %v831 = vld [vmem:[%s824 + $0x30] sm:$0xff]
          %v832 = vld [vmem:[%s824 + $0x38] sm:$0xff]
          %v833 = vld [vmem:[%s824 + $0x40] sm:$0xff]
          %v834 = vld [vmem:[%s824 + $0x48] sm:$0xff]
          %v835 = vld [vmem:[%s824 + $0x50] sm:$0xff]
          %v836 = vld [vmem:[%s824 + $0x58] sm:$0xff]
          %v837 = vld [vmem:[%s824 + $0x60] sm:$0xff]
          %v838 = vld [vmem:[%s824 + $0x68] sm:$0xff]
          %v839 = vld [vmem:[%s824 + $0x70] sm:$0xff]
          %v840 = vld [vmem:[%s824 + $0x78] sm:$0xff]
          %v841 = vld [vmem:[%s824 + $0x80] sm:$0xff]
          %v842 = vld [vmem:[%s824 + $0x88] sm:$0xff]
          %v843 = vld [vmem:[%s824 + $0x90] sm:$0xff]
          %v844 = vld [vmem:[%s824 + $0x98] sm:$0xff]
          %v845 = vld [vmem:[%s824 + $0xa0] sm:$0xff]
          %v846 = vld [vmem:[%s824 + $0xa8] sm:$0xff]
          %v847 = vld [vmem:[%s824 + $0xb0] sm:$0xff]
          %v848 = vld [vmem:[%s824 + $0xb8] sm:$0xff]
          %v849 = vld [vmem:[%s824 + $0xc0] sm:$0xff]
          %v850 = vld [vmem:[%s824 + $0xc8] sm:$0xff]
          %v851 = vld [vmem:[%s824 + $0xd0] sm:$0xff]
          %v852 = vld [vmem:[%s824 + $0xd8] sm:$0xff]
          %v853 = vld [vmem:[%s824 + $0xe0] sm:$0xff]
          %v854 = vld [vmem:[%s824 + $0xe8] sm:$0xff]
          %v855 = vld [vmem:[%s824 + $0xf0] sm:$0xff]
          %v856 = vld [vmem:[%s824 + $0xf8] sm:$0xff]
          %s857 = scalar_lea.vmem %s6, 2
          %v858 = vld [vmem:[%s857] sm:$0x3]
          %v860 = vlaneseq
          %v861 = vshrl.u32 %v860, 7
          %v862 = vsub.s32 0, %v861
          %v863 = vrot.slane %v858, %v862
          %v864 = vlaneseq
          %v865 = vshrl.u32 %v864, 7
          %v866 = vsub.s32 1, %v865
          %v867 = vrot.slane %v858, %v866
          %v902 = vunpack.c.l.b16 %v825
          %v903 = vunpack.c.h.b16 %v825
          %v904 = vunpack.c.l.b16 %v826
          %v905 = vunpack.c.h.b16 %v826
          %v906 = vunpack.c.l.b16 %v827
          %v907 = vunpack.c.h.b16 %v827
          %v908 = vunpack.c.l.b16 %v828
          %v909 = vunpack.c.h.b16 %v828
          %v910 = vunpack.c.l.b16 %v829
          %v911 = vunpack.c.h.b16 %v829
          %v912 = vunpack.c.l.b16 %v830
          %v913 = vunpack.c.h.b16 %v830
          %v914 = vunpack.c.l.b16 %v831
          %v915 = vunpack.c.h.b16 %v831
          %v916 = vunpack.c.l.b16 %v832
          %v917 = vunpack.c.h.b16 %v832
          %v918 = vunpack.c.l.b16 %v833
          %v919 = vunpack.c.h.b16 %v833
          %v920 = vunpack.c.l.b16 %v834
          %v921 = vunpack.c.h.b16 %v834
          %v922 = vunpack.c.l.b16 %v835
          %v923 = vunpack.c.h.b16 %v835
          %v924 = vunpack.c.l.b16 %v836
          %v925 = vunpack.c.h.b16 %v836
          %v926 = vunpack.c.l.b16 %v837
          %v927 = vunpack.c.h.b16 %v837
          %v928 = vunpack.c.l.b16 %v838
          %v929 = vunpack.c.h.b16 %v838
          %v930 = vunpack.c.l.b16 %v839
          %v931 = vunpack.c.h.b16 %v839
          %v932 = vunpack.c.l.b16 %v840
          %v933 = vunpack.c.h.b16 %v840
          %v934 = vunpack.c.l.b16 %v841
          %v935 = vunpack.c.h.b16 %v841
          %v936 = vunpack.c.l.b16 %v842
          %v937 = vunpack.c.h.b16 %v842
          %v938 = vunpack.c.l.b16 %v843
          %v939 = vunpack.c.h.b16 %v843
          %v940 = vunpack.c.l.b16 %v844
          %v941 = vunpack.c.h.b16 %v844
          %v942 = vunpack.c.l.b16 %v845
          %v943 = vunpack.c.h.b16 %v845
          %v944 = vunpack.c.l.b16 %v846
          %v945 = vunpack.c.h.b16 %v846
          %v946 = vunpack.c.l.b16 %v847
          %v947 = vunpack.c.h.b16 %v847
          %v948 = vunpack.c.l.b16 %v848
          %v949 = vunpack.c.h.b16 %v848
          %v950 = vunpack.c.l.b16 %v849
          %v951 = vunpack.c.h.b16 %v849
          %v952 = vunpack.c.l.b16 %v850
          %v953 = vunpack.c.h.b16 %v850
          %v954 = vunpack.c.l.b16 %v851
          %v955 = vunpack.c.h.b16 %v851
          %v956 = vunpack.c.l.b16 %v852
          %v957 = vunpack.c.h.b16 %v852
          %v958 = vunpack.c.l.b16 %v853
          %v959 = vunpack.c.h.b16 %v853
          %v960 = vunpack.c.l.b16 %v854
          %v961 = vunpack.c.h.b16 %v854
          %v962 = vunpack.c.l.b16 %v855
          %v963 = vunpack.c.h.b16 %v855
          %v964 = vunpack.c.l.b16 %v856
          %v965 = vunpack.c.h.b16 %v856
          %v966 = vpack.c.b16 %v904, %v902
          %v967 = vpack.c.b16 %v905, %v903
          %v968 = vpack.c.b16 %v908, %v906
          %v969 = vpack.c.b16 %v909, %v907
          %v970 = vpack.c.b16 %v912, %v910
          %v971 = vpack.c.b16 %v913, %v911
          %v972 = vpack.c.b16 %v916, %v914
          %v973 = vpack.c.b16 %v917, %v915
          %v974 = vpack.c.b16 %v920, %v918
          %v975 = vpack.c.b16 %v921, %v919
          %v976 = vpack.c.b16 %v924, %v922
          %v977 = vpack.c.b16 %v925, %v923
          %v978 = vpack.c.b16 %v928, %v926
          %v979 = vpack.c.b16 %v929, %v927
          %v980 = vpack.c.b16 %v932, %v930
          %v981 = vpack.c.b16 %v933, %v931
          %v982 = vpack.c.b16 %v936, %v934
          %v983 = vpack.c.b16 %v937, %v935
          %v984 = vpack.c.b16 %v940, %v938
          %v985 = vpack.c.b16 %v941, %v939
          %v986 = vpack.c.b16 %v944, %v942
          %v987 = vpack.c.b16 %v945, %v943
          %v988 = vpack.c.b16 %v948, %v946
          %v989 = vpack.c.b16 %v949, %v947
          %v990 = vpack.c.b16 %v952, %v950
          %v991 = vpack.c.b16 %v953, %v951
          %v992 = vpack.c.b16 %v956, %v954
          %v993 = vpack.c.b16 %v957, %v955
          %v994 = vpack.c.b16 %v960, %v958
          %v995 = vpack.c.b16 %v961, %v959
          %v996 = vpack.c.b16 %v964, %v962
          %v997 = vpack.c.b16 %v965, %v963
          %1030 = vmatprep.subr.bf16.mxu0 %v967
          %1031 = vmatpush1.bf16.msra.mxu0 %v966
          %1032 = vmatprep.subr.bf16.mxu0 %v969
          %1033 = vmatpush1.bf16.msra.mxu0 %v968
          %1034 = vmatprep.subr.bf16.mxu0 %v971
          %1035 = vmatpush1.bf16.msra.mxu0 %v970
          %1036 = vmatprep.subr.bf16.mxu0 %v973
          %1037 = vmatpush1.bf16.msra.mxu0 %v972
          %1038 = vmatprep.subr.bf16.mxu0 %v975
          %1039 = vmatpush1.bf16.msra.mxu0 %v974
          %1040 = vmatprep.subr.bf16.mxu0 %v977
          %1041 = vmatpush1.bf16.msra.mxu0 %v976
          %1042 = vmatprep.subr.bf16.mxu0 %v979
          %1043 = vmatpush1.bf16.msra.mxu0 %v978
          %1044 = vmatprep.subr.bf16.mxu0 %v981
          %1045 = vmatpush1.bf16.msra.mxu0 %v980
          %1046 = vmatprep.subr.bf16.mxu0 %v983
          %1047 = vmatpush1.bf16.msra.mxu0 %v982
          %1048 = vmatprep.subr.bf16.mxu0 %v985
          %1049 = vmatpush1.bf16.msra.mxu0 %v984
          %1050 = vmatprep.subr.bf16.mxu0 %v987
          %1051 = vmatpush1.bf16.msra.mxu0 %v986
          %1052 = vmatprep.subr.bf16.mxu0 %v989
          %1053 = vmatpush1.bf16.msra.mxu0 %v988
          %1054 = vmatprep.subr.bf16.mxu0 %v991
          %1055 = vmatpush1.bf16.msra.mxu0 %v990
          %1056 = vmatprep.subr.bf16.mxu0 %v993
          %1057 = vmatpush1.bf16.msra.mxu0 %v992
          %1058 = vmatprep.subr.bf16.mxu0 %v995
          %1059 = vmatpush1.bf16.msra.mxu0 %v994
          %1060 = vmatprep.subr.bf16.mxu0 %v997
          %1061 = vmatpush1.bf16.msra.mxu0 %v996
          %1062 = vmatprep.mubr.bf16.mxu0 %v823
          %1063 = vmatmul.mubr.bf16.gmra.mrb[0].mxu0 %v822
          %v1064 = vpop.f32.mrb[0].mxu0
          %v1065 = vadd.f32 %v863, %v1064
          %v1066 = vpop.f32.mrb[0].mxu0
          %v1067 = vadd.f32 %v867, %v1066
          %v1068 = vpop.f32.mrb[0].mxu0
          %v1069 = vpop.f32.mrb[0].mxu0
          %1070 = vdwg.mxu0
          %s1071 = sld [smem:[#allocation3 + $0x2]]
          %vm1072 = vcmp.gt.f32.partialorder %v1065, 0.0
          %vm1073 = vcmp.gt.f32.partialorder %v1067, 0.0
          %v1074 = vstv %s1071
          %v1075 = vmul.f32 %v1074, %v1065
          %v1076 = vmul.f32 %v1074, %v1067
          %v1077 = vsel %vm1072, %v1065, %v1075
          %v1078 = vsel %vm1073, %v1067, %v1076
          %1079 = vst [vmem:[#allocation14] sm:$0xff] %v1077
          %1080 = vst [vmem:[#allocation14 + $0x8] sm:$0xff] %v1078
        $region80: #{tpu_custom_call.1} parent=47 // pred_fallthru
          _
        // Predicated region
        $region81: #{tpu_custom_call.1} parent=47 // pred_check
          %p1081 = pneg %p202
        $region82: #{tpu_custom_call.1} parent=47 // pred_check_branch
          %1083 = sbr.rel (%p1081) target = $region84
        $region83: #{tpu_custom_call.1} parent=47 // pred_region
          %s1085 = ssub.s32 256, 256
          %1086 = vsyncadd [#allocation5], %s1085
          %s1088 = sshll.u32 [#allocation14], 4
          %s1089 = int_to_ptr.vmem [resolvable:$true] %s1088
          %1091 = dma.vmem_to_hbm [thread:$0]  %s1089, 256, %s7, [#allocation5]
        $region84: #{tpu_custom_call.1} parent=47 // pred_fallthru
          _
        // Predicated region
        $region85: #{tpu_custom_call.1} parent=47 // pred_check
          %p1092 = pneg %p202
        $region86: #{tpu_custom_call.1} parent=47 // pred_check_branch
          %1094 = sbr.rel (%p1092) target = $region88
        $region87: #{tpu_custom_call.1} parent=47 // pred_region
          %1095 = dma.done [#allocation5], 256
        $region88: #{tpu_custom_call.1} parent=47 // pred_fallthru
          _
      $region48: #{tpu_custom_call.1} parent=5 // pred_fallthru
        _
      %p1096 = scmp.le.s32.totalorder 2, %s22
      // Predicated region
      $region89: #{tpu_custom_call.1} parent=5 // pred_check
        %p1097 = pneg %p1096
      $region90: #{tpu_custom_call.1} parent=5 // pred_check_branch
        %1099 = sbr.rel (%p1097) target = $region92
      $region91: #{tpu_custom_call.1} parent=5 // pred_region
        %s1100 = ssub.s32 %s22, 2
      $region92: #{tpu_custom_call.1} parent=5 // pred_fallthru
        _
    $region6: #{tpu_custom_call.1} parent=1 // loop_footer
      %s26 = sadd.s32 1, %s22
    $region7: #{tpu_custom_call.1} parent=1 // loop_footer_branch
      %21 = sbr.rel target = $region3
    $region8: #{tpu_custom_call.1} parent=1 // loop_exit
      _
    %1101 = vsyncpa [#allocation4], 1
    %s1102 = scalar_lea.sflag [#allocation4], 1
    %1103 = vsyncpa %s1102, 1
    %1104 = vsyncpa [#allocation9], 1
    %s1105 = scalar_lea.sflag [#allocation9], 1
    %1106 = vsyncpa %s1105, 1
    %1107 = vsyncpa [#allocation12], 1
    %1108 = vsyncpa [#allocation5], 1
    %s1109 = scalar_lea.sflag [#allocation5], 1
    %1110 = vsyncpa %s1109, 1
    %1111 = vsyncpa [#allocation6], 1
    %s1112 = scalar_lea.sflag [#allocation6], 1
    %1113 = vsyncpa %s1112, 1

</llo_original>
